<compile_context>
chip_gen: v7x
topology: tpu7x:2x2x1
jax: 0.10.0
libtpu: 0.0.40
codegen_flags: <defaults>
</compile_context>

<pallas_src>
import jax
import jax.numpy as jnp
from jax import lax
from jax.experimental import pallas as pl
from jax.experimental.pallas import tpu as pltpu


def _gru_kernel(gate_in_ref,   # (T, B, 3H): [in_r + b_ir + b_hr | in_z + b_iz + b_hz | in_n + b_in_gate]
                w_h_ref,       # (H, 3H)   : [W_hr | W_hz | W_hn] (pre-transposed for h @ W)
                b_hg_ref,      # (1, H)    : b_hn (cannot be merged: sits inside r * (...))
                h_out_ref):    # (T, B, H)
    T, B, threeH = gate_in_ref.shape
    H = threeH // 3

    w_h = w_h_ref[...]        # only the fused hidden weight + one bias live across the loop
    b_hg = b_hg_ref[...]

    def step(t, h):
        pre = gate_in_ref[t]                                            # (B, 3H)
        hid = jnp.dot(h, w_h, preferred_element_type=jnp.float32)       # (B, 3H) single MXU push
        # GRU cell (PyTorch gate order r, z, n):
        #   r  = sigmoid(x_r + h@W_hr + b)      z = sigmoid(x_z + h@W_hz + b)
        #   n  = tanh(x_n + b_in + r * (h@W_hn + b_hn))
        #   h' = (1 - z) * n + z * h
        rz = jax.nn.sigmoid(pre[:, :2 * H] + hid[:, :2 * H])            # one EUP slab for r|z
        r = rz[:, :H]
        z = rz[:, H:]
        n = jnp.tanh(pre[:, 2 * H:] + r * (hid[:, 2 * H:] + b_hg))
        h_new = (1.0 - z) * n + z * h
        h_out_ref[t] = h_new
        return h_new

    h0 = jnp.zeros((B, H), jnp.float32)
    lax.fori_loop(0, T, step, h0, unroll=True)                          # T static & small


@jax.jit
def simple_rnn_forward(x_seq, u_seq, params):
    """x_seq: [B, T, 2], u_seq: [B, T, 1]  ->  (x_new_seq [B, T, 2], hidden_new_seq [B, T, H])."""
    B, T, _ = x_seq.shape
    H = params["w_in"].shape[1]

    # ---- hoisted input path (independent of h -> off the serial critical path) ----
    xu = jnp.concatenate([x_seq, u_seq], axis=-1).astype(jnp.float32)   # (B, T, 3)
    feat = jnp.maximum(xu @ params["w_in"] + params["b_in"], 0.0)       # (B, T, H)

    w_i = jnp.concatenate(
        [params["w_ir"], params["w_iz"], params["w_ig"]], axis=1)       # (H, 3H)
    b_fused = jnp.concatenate(
        [params["b_ir"] + params["b_hr"],
         params["b_iz"] + params["b_hz"],
         params["b_ig"]], axis=1)                                       # (1, 3H)
    gate_in = feat @ w_i + b_fused                                      # (B, T, 3H)
    gate_in = jnp.transpose(gate_in, (1, 0, 2))                         # (T, B, 3H) time-major

    w_h = jnp.concatenate(
        [params["w_hr"], params["w_hz"], params["w_hg"]], axis=1)       # (H, 3H)

    vmem = pl.BlockSpec(memory_space=pltpu.MemorySpace.VMEM)
    h_out = pl.pallas_call(
        _gru_kernel,
        out_shape=jax.ShapeDtypeStruct((T, B, H), jnp.float32),
        in_specs=[vmem, vmem, vmem],
        out_specs=vmem,
    )(gate_in, w_h, params["b_hg"])                                     # (T, B, H)

    # ---- hoisted output Linear (H -> 2): one batched matmul, no lane-sparse stores ----
    x_out = h_out @ params["w_out"] + params["b_out"]                   # (T, B, 2)

    # back to batch-first (matches torch.stack(...).transpose(0, 1))
    return jnp.transpose(x_out, (1, 0, 2)), jnp.transpose(h_out, (1, 0, 2))


def init_params(key, n_rnncell):
    """Deterministic parameter init mirroring the PyTorch module's shapes.

    in_feat Linear(3,H): xavier-normal weight, normal bias.
    out_feat Linear(H,2): xavier-normal weight, normal bias.
    GRU(H,H): PyTorch default uniform(-1/sqrt(H), 1/sqrt(H)) for all params
    (init_weights is a no-op on nn.GRU).
    Weights are stored pre-transposed for `x @ W`.
    """
    H = n_rnncell
    keys = jax.random.split(key, 20)
    k = iter(keys)

    def xavier(kk, fan_in, fan_out):
        std = (2.0 / (fan_in + fan_out)) ** 0.5
        return std * jax.random.normal(kk, (fan_in, fan_out), jnp.float32)

    bound = 1.0 / (H ** 0.5)

    def gru_w(kk):
        return jax.random.uniform(kk, (H, H), jnp.float32, -bound, bound)

    def gru_b(kk):
        return jax.random.uniform(kk, (1, H), jnp.float32, -bound, bound)

    params = {
        "w_in": xavier(next(k), 3, H),                                   # (3, H)
        "b_in": jax.random.normal(next(k), (1, H), jnp.float32),         # (1, H)
        "w_ir": gru_w(next(k)), "w_iz": gru_w(next(k)), "w_ig": gru_w(next(k)),
        "w_hr": gru_w(next(k)), "w_hz": gru_w(next(k)), "w_hg": gru_w(next(k)),
        "b_ir": gru_b(next(k)), "b_iz": gru_b(next(k)), "b_ig": gru_b(next(k)),
        "b_hr": gru_b(next(k)), "b_hz": gru_b(next(k)), "b_hg": gru_b(next(k)),
        "w_out": xavier(next(k), H, 2),                                  # (H, 2)
        "b_out": jax.random.normal(next(k), (1, 2), jnp.float32),        # (1, 2)
    }
    return params


def ref_forward(x_seq, u_seq, params):
    """Pure-JAX reference of the PyTorch forward (for correctness check)."""
    B, T, _ = x_seq.shape
    H = params["w_in"].shape[1]
    xu = jnp.concatenate([x_seq, u_seq], axis=-1)  # (B, T, 3)

    def step(h, xu_t):
        feat = jnp.maximum(xu_t @ params["w_in"] + params["b_in"], 0.0)
        r = jax.nn.sigmoid(feat @ params["w_ir"] + params["b_ir"]
                           + h @ params["w_hr"] + params["b_hr"])
        z = jax.nn.sigmoid(feat @ params["w_iz"] + params["b_iz"]
                           + h @ params["w_hz"] + params["b_hz"])
        n = jnp.tanh(feat @ params["w_ig"] + params["b_ig"]
                     + r * (h @ params["w_hg"] + params["b_hg"]))
        h_new = (1.0 - z) * n + z * h
        y = h_new @ params["w_out"] + params["b_out"]
        return h_new, (y, h_new)

    h0 = jnp.zeros((B, H), jnp.float32)
    _, (ys, hs) = lax.scan(step, h0, jnp.transpose(xu, (1, 0, 2)))
    return jnp.transpose(ys, (1, 0, 2)), jnp.transpose(hs, (1, 0, 2))


if __name__ == "__main__":
    B, T, H = 2, 8, 32           # batch, sequence length, n_rnncell
    key = jax.random.PRNGKey(0)
    k_p, k_x, k_u = jax.random.split(key, 3)

    params = init_params(k_p, H)
    x_seq = jax.random.normal(k_x, (B, T, 2), jnp.float32)   # state sequence
    u_seq = jax.random.normal(k_u, (B, T, 1), jnp.float32)   # control sequence

    x_out, h_out = simple_rnn_forward(x_seq, u_seq, params)
    jax.block_until_ready((x_out, h_out))

    x_ref, h_ref = ref_forward(x_seq, u_seq, params)
    assert x_out.shape == (B, T, 2) and h_out.shape == (B, T, H)
    assert jnp.allclose(x_out, x_ref, rtol=1e-4, atol=1e-4)
    assert jnp.allclose(h_out, h_ref, rtol=1e-4, atol=1e-4)

    print("KERNEL_OK")
</pallas_src>

<mosaic_0001>
module attributes {stable_mosaic.version = 11 : i64} {
  func.func @_gru_kernel(%arg0: memref<8x2x96xf32, #tpu.memory_space<vmem>>, %arg1: memref<32x96xf32, #tpu.memory_space<vmem>>, %arg2: memref<1x32xf32, #tpu.memory_space<vmem>>, %arg3: memref<8x2x32xf32, #tpu.memory_space<vmem>>) attributes {dimension_semantics = [], scalar_prefetch = 0 : i64, scratch_operands = 0 : i64, tpu.core_type = #tpu.core_type<tc>} {
    %c0 = arith.constant 0 : index
    %c0_0 = arith.constant 0 : index
    %0 = vector.load %arg1[%c0, %c0_0] : memref<32x96xf32, #tpu.memory_space<vmem>>, vector<32x96xf32>
    %c0_1 = arith.constant 0 : index
    %c0_2 = arith.constant 0 : index
    %1 = vector.load %arg2[%c0_1, %c0_2] : memref<1x32xf32, #tpu.memory_space<vmem>>, vector<1x32xf32>
    %cst = arith.constant 0.000000e+00 : f32
    %2 = vector.broadcast %cst : f32 to vector<2x32xf32>
    %c0_i32 = arith.constant 0 : i32
    %3 = arith.index_cast %c0_i32 : i32 to index
    %c0_3 = arith.constant 0 : index
    %c0_4 = arith.constant 0 : index
    %4 = vector.load %arg0[%3, %c0_3, %c0_4] : memref<8x2x96xf32, #tpu.memory_space<vmem>>, vector<1x2x96xf32>
    %5 = vector.shape_cast %4 : vector<1x2x96xf32> to vector<2x96xf32>
    %cst_5 = arith.constant dense<0.000000e+00> : vector<2x96xf32>
    %6 = tpu.matmul %2, %0, %cst_5 {dimension_numbers = #tpu.dot_dimension_numbers<[1], [0], [0], [1], [0, 0, 1, 1], [], []>} : vector<2x32xf32>, vector<32x96xf32>, vector<2x96xf32> -> vector<2x96xf32>
    %7 = vector.extract_strided_slice %5 {offsets = [0, 0], sizes = [2, 64], strides = [1, 1]} : vector<2x96xf32> to vector<2x64xf32>
    %8 = vector.extract_strided_slice %6 {offsets = [0, 0], sizes = [2, 64], strides = [1, 1]} : vector<2x96xf32> to vector<2x64xf32>
    %9 = arith.addf %7, %8 : vector<2x64xf32>
    %10 = arith.negf %9 : vector<2x64xf32>
    %11 = math.exp %10 : vector<2x64xf32>
    %cst_6 = arith.constant 1.000000e+00 : f32
    %12 = vector.broadcast %cst_6 : f32 to vector<2x64xf32>
    %13 = arith.addf %12, %11 : vector<2x64xf32>
    %14 = arith.divf %12, %13 : vector<2x64xf32>
    %15 = vector.extract_strided_slice %14 {offsets = [0, 0], sizes = [2, 32], strides = [1, 1]} : vector<2x64xf32> to vector<2x32xf32>
    %16 = vector.extract_strided_slice %14 {offsets = [0, 32], sizes = [2, 32], strides = [1, 1]} : vector<2x64xf32> to vector<2x32xf32>
    %17 = vector.extract_strided_slice %5 {offsets = [0, 64], sizes = [2, 32], strides = [1, 1]} : vector<2x96xf32> to vector<2x32xf32>
    %18 = vector.extract_strided_slice %6 {offsets = [0, 64], sizes = [2, 32], strides = [1, 1]} : vector<2x96xf32> to vector<2x32xf32>
    %19 = vector.broadcast %1 : vector<1x32xf32> to vector<2x32xf32>
    %20 = arith.addf %18, %19 : vector<2x32xf32>
    %21 = arith.mulf %15, %20 : vector<2x32xf32>
    %22 = arith.addf %17, %21 : vector<2x32xf32>
    %23 = math.tanh %22 : vector<2x32xf32>
    %cst_7 = arith.constant 1.000000e+00 : f32
    %24 = vector.broadcast %cst_7 : f32 to vector<2x32xf32>
    %25 = arith.subf %24, %16 : vector<2x32xf32>
    %26 = arith.mulf %25, %23 : vector<2x32xf32>
    %27 = arith.mulf %16, %2 : vector<2x32xf32>
    %28 = arith.addf %26, %27 : vector<2x32xf32>
    %29 = arith.index_cast %c0_i32 : i32 to index
    %c0_8 = arith.constant 0 : index
    %c0_9 = arith.constant 0 : index
    %30 = vector.load %arg3[%29, %c0_8, %c0_9] : memref<8x2x32xf32, #tpu.memory_space<vmem>>, vector<1x2x32xf32>
    %31 = vector.shape_cast %30 : vector<1x2x32xf32> to vector<2x32xf32>
    %32 = vector.shape_cast %28 : vector<2x32xf32> to vector<1x2x32xf32>
    tpu.vector_store %arg3[%29, %c0_8, %c0_9], %32 {strides = array<i32>} : memref<8x2x32xf32, #tpu.memory_space<vmem>>, vector<1x2x32xf32>,
    %c1_i32 = arith.constant 1 : i32
    %33 = arith.index_cast %c1_i32 : i32 to index
    %c0_10 = arith.constant 0 : index
    %c0_11 = arith.constant 0 : index
    %34 = vector.load %arg0[%33, %c0_10, %c0_11] : memref<8x2x96xf32, #tpu.memory_space<vmem>>, vector<1x2x96xf32>
    %35 = vector.shape_cast %34 : vector<1x2x96xf32> to vector<2x96xf32>
    %cst_12 = arith.constant dense<0.000000e+00> : vector<2x96xf32>
    %36 = tpu.matmul %28, %0, %cst_12 {dimension_numbers = #tpu.dot_dimension_numbers<[1], [0], [0], [1], [0, 0, 1, 1], [], []>} : vector<2x32xf32>, vector<32x96xf32>, vector<2x96xf32> -> vector<2x96xf32>
    %37 = vector.extract_strided_slice %35 {offsets = [0, 0], sizes = [2, 64], strides = [1, 1]} : vector<2x96xf32> to vector<2x64xf32>
    %38 = vector.extract_strided_slice %36 {offsets = [0, 0], sizes = [2, 64], strides = [1, 1]} : vector<2x96xf32> to vector<2x64xf32>
    %39 = arith.addf %37, %38 : vector<2x64xf32>
    %40 = arith.negf %39 : vector<2x64xf32>
    %41 = math.exp %40 : vector<2x64xf32>
    %cst_13 = arith.constant 1.000000e+00 : f32
    %42 = vector.broadcast %cst_13 : f32 to vector<2x64xf32>
    %43 = arith.addf %42, %41 : vector<2x64xf32>
    %44 = arith.divf %42, %43 : vector<2x64xf32>
    %45 = vector.extract_strided_slice %44 {offsets = [0, 0], sizes = [2, 32], strides = [1, 1]} : vector<2x64xf32> to vector<2x32xf32>
    %46 = vector.extract_strided_slice %44 {offsets = [0, 32], sizes = [2, 32], strides = [1, 1]} : vector<2x64xf32> to vector<2x32xf32>
    %47 = vector.extract_strided_slice %35 {offsets = [0, 64], sizes = [2, 32], strides = [1, 1]} : vector<2x96xf32> to vector<2x32xf32>
    %48 = vector.extract_strided_slice %36 {offsets = [0, 64], sizes = [2, 32], strides = [1, 1]} : vector<2x96xf32> to vector<2x32xf32>
    %49 = vector.broadcast %1 : vector<1x32xf32> to vector<2x32xf32>
    %50 = arith.addf %48, %49 : vector<2x32xf32>
    %51 = arith.mulf %45, %50 : vector<2x32xf32>
    %52 = arith.addf %47, %51 : vector<2x32xf32>
    %53 = math.tanh %52 : vector<2x32xf32>
    %cst_14 = arith.constant 1.000000e+00 : f32
    %54 = vector.broadcast %cst_14 : f32 to vector<2x32xf32>
    %55 = arith.subf %54, %46 : vector<2x32xf32>
    %56 = arith.mulf %55, %53 : vector<2x32xf32>
    %57 = arith.mulf %46, %28 : vector<2x32xf32>
    %58 = arith.addf %56, %57 : vector<2x32xf32>
    %59 = arith.index_cast %c1_i32 : i32 to index
    %c0_15 = arith.constant 0 : index
    %c0_16 = arith.constant 0 : index
    %60 = vector.load %arg3[%59, %c0_15, %c0_16] : memref<8x2x32xf32, #tpu.memory_space<vmem>>, vector<1x2x32xf32>
    %61 = vector.shape_cast %60 : vector<1x2x32xf32> to vector<2x32xf32>
    %62 = vector.shape_cast %58 : vector<2x32xf32> to vector<1x2x32xf32>
    tpu.vector_store %arg3[%59, %c0_15, %c0_16], %62 {strides = array<i32>} : memref<8x2x32xf32, #tpu.memory_space<vmem>>, vector<1x2x32xf32>,
    %c2_i32 = arith.constant 2 : i32
    %63 = arith.index_cast %c2_i32 : i32 to index
    %c0_17 = arith.constant 0 : index
    %c0_18 = arith.constant 0 : index
    %64 = vector.load %arg0[%63, %c0_17, %c0_18] : memref<8x2x96xf32, #tpu.memory_space<vmem>>, vector<1x2x96xf32>
    %65 = vector.shape_cast %64 : vector<1x2x96xf32> to vector<2x96xf32>
    %cst_19 = arith.constant dense<0.000000e+00> : vector<2x96xf32>
    %66 = tpu.matmul %58, %0, %cst_19 {dimension_numbers = #tpu.dot_dimension_numbers<[1], [0], [0], [1], [0, 0, 1, 1], [], []>} : vector<2x32xf32>, vector<32x96xf32>, vector<2x96xf32> -> vector<2x96xf32>
    %67 = vector.extract_strided_slice %65 {offsets = [0, 0], sizes = [2, 64], strides = [1, 1]} : vector<2x96xf32> to vector<2x64xf32>
    %68 = vector.extract_strided_slice %66 {offsets = [0, 0], sizes = [2, 64], strides = [1, 1]} : vector<2x96xf32> to vector<2x64xf32>
    %69 = arith.addf %67, %68 : vector<2x64xf32>
    %70 = arith.negf %69 : vector<2x64xf32>
    %71 = math.exp %70 : vector<2x64xf32>
    %cst_20 = arith.constant 1.000000e+00 : f32
    %72 = vector.broadcast %cst_20 : f32 to vector<2x64xf32>
    %73 = arith.addf %72, %71 : vector<2x64xf32>
    %74 = arith.divf %72, %73 : vector<2x64xf32>
    %75 = vector.extract_strided_slice %74 {offsets = [0, 0], sizes = [2, 32], strides = [1, 1]} : vector<2x64xf32> to vector<2x32xf32>
    %76 = vector.extract_strided_slice %74 {offsets = [0, 32], sizes = [2, 32], strides = [1, 1]} : vector<2x64xf32> to vector<2x32xf32>
    %77 = vector.extract_strided_slice %65 {offsets = [0, 64], sizes = [2, 32], strides = [1, 1]} : vector<2x96xf32> to vector<2x32xf32>
    %78 = vector.extract_strided_slice %66 {offsets = [0, 64], sizes = [2, 32], strides = [1, 1]} : vector<2x96xf32> to vector<2x32xf32>
    %79 = vector.broadcast %1 : vector<1x32xf32> to vector<2x32xf32>
    %80 = arith.addf %78, %79 : vector<2x32xf32>
    %81 = arith.mulf %75, %80 : vector<2x32xf32>
    %82 = arith.addf %77, %81 : vector<2x32xf32>
    %83 = math.tanh %82 : vector<2x32xf32>
    %cst_21 = arith.constant 1.000000e+00 : f32
    %84 = vector.broadcast %cst_21 : f32 to vector<2x32xf32>
    %85 = arith.subf %84, %76 : vector<2x32xf32>
    %86 = arith.mulf %85, %83 : vector<2x32xf32>
    %87 = arith.mulf %76, %58 : vector<2x32xf32>
    %88 = arith.addf %86, %87 : vector<2x32xf32>
    %89 = arith.index_cast %c2_i32 : i32 to index
    %c0_22 = arith.constant 0 : index
    %c0_23 = arith.constant 0 : index
    %90 = vector.load %arg3[%89, %c0_22, %c0_23] : memref<8x2x32xf32, #tpu.memory_space<vmem>>, vector<1x2x32xf32>
    %91 = vector.shape_cast %90 : vector<1x2x32xf32> to vector<2x32xf32>
    %92 = vector.shape_cast %88 : vector<2x32xf32> to vector<1x2x32xf32>
    tpu.vector_store %arg3[%89, %c0_22, %c0_23], %92 {strides = array<i32>} : memref<8x2x32xf32, #tpu.memory_space<vmem>>, vector<1x2x32xf32>,
    %c3_i32 = arith.constant 3 : i32
    %93 = arith.index_cast %c3_i32 : i32 to index
    %c0_24 = arith.constant 0 : index
    %c0_25 = arith.constant 0 : index
    %94 = vector.load %arg0[%93, %c0_24, %c0_25] : memref<8x2x96xf32, #tpu.memory_space<vmem>>, vector<1x2x96xf32>
    %95 = vector.shape_cast %94 : vector<1x2x96xf32> to vector<2x96xf32>
    %cst_26 = arith.constant dense<0.000000e+00> : vector<2x96xf32>
    %96 = tpu.matmul %88, %0, %cst_26 {dimension_numbers = #tpu.dot_dimension_numbers<[1], [0], [0], [1], [0, 0, 1, 1], [], []>} : vector<2x32xf32>, vector<32x96xf32>, vector<2x96xf32> -> vector<2x96xf32>
    %97 = vector.extract_strided_slice %95 {offsets = [0, 0], sizes = [2, 64], strides = [1, 1]} : vector<2x96xf32> to vector<2x64xf32>
    %98 = vector.extract_strided_slice %96 {offsets = [0, 0], sizes = [2, 64], strides = [1, 1]} : vector<2x96xf32> to vector<2x64xf32>
    %99 = arith.addf %97, %98 : vector<2x64xf32>
    %100 = arith.negf %99 : vector<2x64xf32>
    %101 = math.exp %100 : vector<2x64xf32>
    %cst_27 = arith.constant 1.000000e+00 : f32
    %102 = vector.broadcast %cst_27 : f32 to vector<2x64xf32>
    %103 = arith.addf %102, %101 : vector<2x64xf32>
    %104 = arith.divf %102, %103 : vector<2x64xf32>
    %105 = vector.extract_strided_slice %104 {offsets = [0, 0], sizes = [2, 32], strides = [1, 1]} : vector<2x64xf32> to vector<2x32xf32>
    %106 = vector.extract_strided_slice %104 {offsets = [0, 32], sizes = [2, 32], strides = [1, 1]} : vector<2x64xf32> to vector<2x32xf32>
    %107 = vector.extract_strided_slice %95 {offsets = [0, 64], sizes = [2, 32], strides = [1, 1]} : vector<2x96xf32> to vector<2x32xf32>
    %108 = vector.extract_strided_slice %96 {offsets = [0, 64], sizes = [2, 32], strides = [1, 1]} : vector<2x96xf32> to vector<2x32xf32>
    %109 = vector.broadcast %1 : vector<1x32xf32> to vector<2x32xf32>
    %110 = arith.addf %108, %109 : vector<2x32xf32>
    %111 = arith.mulf %105, %110 : vector<2x32xf32>
    %112 = arith.addf %107, %111 : vector<2x32xf32>
    %113 = math.tanh %112 : vector<2x32xf32>
    %cst_28 = arith.constant 1.000000e+00 : f32
    %114 = vector.broadcast %cst_28 : f32 to vector<2x32xf32>
    %115 = arith.subf %114, %106 : vector<2x32xf32>
    %116 = arith.mulf %115, %113 : vector<2x32xf32>
    %117 = arith.mulf %106, %88 : vector<2x32xf32>
    %118 = arith.addf %116, %117 : vector<2x32xf32>
    %119 = arith.index_cast %c3_i32 : i32 to index
    %c0_29 = arith.constant 0 : index
    %c0_30 = arith.constant 0 : index
    %120 = vector.load %arg3[%119, %c0_29, %c0_30] : memref<8x2x32xf32, #tpu.memory_space<vmem>>, vector<1x2x32xf32>
    %121 = vector.shape_cast %120 : vector<1x2x32xf32> to vector<2x32xf32>
    %122 = vector.shape_cast %118 : vector<2x32xf32> to vector<1x2x32xf32>
    tpu.vector_store %arg3[%119, %c0_29, %c0_30], %122 {strides = array<i32>} : memref<8x2x32xf32, #tpu.memory_space<vmem>>, vector<1x2x32xf32>,
    %c4_i32 = arith.constant 4 : i32
    %123 = arith.index_cast %c4_i32 : i32 to index
    %c0_31 = arith.constant 0 : index
    %c0_32 = arith.constant 0 : index
    %124 = vector.load %arg0[%123, %c0_31, %c0_32] : memref<8x2x96xf32, #tpu.memory_space<vmem>>, vector<1x2x96xf32>
    %125 = vector.shape_cast %124 : vector<1x2x96xf32> to vector<2x96xf32>
    %cst_33 = arith.constant dense<0.000000e+00> : vector<2x96xf32>
    %126 = tpu.matmul %118, %0, %cst_33 {dimension_numbers = #tpu.dot_dimension_numbers<[1], [0], [0], [1], [0, 0, 1, 1], [], []>} : vector<2x32xf32>, vector<32x96xf32>, vector<2x96xf32> -> vector<2x96xf32>
    %127 = vector.extract_strided_slice %125 {offsets = [0, 0], sizes = [2, 64], strides = [1, 1]} : vector<2x96xf32> to vector<2x64xf32>
    %128 = vector.extract_strided_slice %126 {offsets = [0, 0], sizes = [2, 64], strides = [1, 1]} : vector<2x96xf32> to vector<2x64xf32>
    %129 = arith.addf %127, %128 : vector<2x64xf32>
    %130 = arith.negf %129 : vector<2x64xf32>
    %131 = math.exp %130 : vector<2x64xf32>
    %cst_34 = arith.constant 1.000000e+00 : f32
    %132 = vector.broadcast %cst_34 : f32 to vector<2x64xf32>
    %133 = arith.addf %132, %131 : vector<2x64xf32>
    %134 = arith.divf %132, %133 : vector<2x64xf32>
    %135 = vector.extract_strided_slice %134 {offsets = [0, 0], sizes = [2, 32], strides = [1, 1]} : vector<2x64xf32> to vector<2x32xf32>
    %136 = vector.extract_strided_slice %134 {offsets = [0, 32], sizes = [2, 32], strides = [1, 1]} : vector<2x64xf32> to vector<2x32xf32>
    %137 = vector.extract_strided_slice %125 {offsets = [0, 64], sizes = [2, 32], strides = [1, 1]} : vector<2x96xf32> to vector<2x32xf32>
    %138 = vector.extract_strided_slice %126 {offsets = [0, 64], sizes = [2, 32], strides = [1, 1]} : vector<2x96xf32> to vector<2x32xf32>
    %139 = vector.broadcast %1 : vector<1x32xf32> to vector<2x32xf32>
    %140 = arith.addf %138, %139 : vector<2x32xf32>
    %141 = arith.mulf %135, %140 : vector<2x32xf32>
    %142 = arith.addf %137, %141 : vector<2x32xf32>
    %143 = math.tanh %142 : vector<2x32xf32>
    %cst_35 = arith.constant 1.000000e+00 : f32
    %144 = vector.broadcast %cst_35 : f32 to vector<2x32xf32>
    %145 = arith.subf %144, %136 : vector<2x32xf32>
    %146 = arith.mulf %145, %143 : vector<2x32xf32>
    %147 = arith.mulf %136, %118 : vector<2x32xf32>
    %148 = arith.addf %146, %147 : vector<2x32xf32>
    %149 = arith.index_cast %c4_i32 : i32 to index
    %c0_36 = arith.constant 0 : index
    %c0_37 = arith.constant 0 : index
    %150 = vector.load %arg3[%149, %c0_36, %c0_37] : memref<8x2x32xf32, #tpu.memory_space<vmem>>, vector<1x2x32xf32>
    %151 = vector.shape_cast %150 : vector<1x2x32xf32> to vector<2x32xf32>
    %152 = vector.shape_cast %148 : vector<2x32xf32> to vector<1x2x32xf32>
    tpu.vector_store %arg3[%149, %c0_36, %c0_37], %152 {strides = array<i32>} : memref<8x2x32xf32, #tpu.memory_space<vmem>>, vector<1x2x32xf32>,
    %c5_i32 = arith.constant 5 : i32
    %153 = arith.index_cast %c5_i32 : i32 to index
    %c0_38 = arith.constant 0 : index
    %c0_39 = arith.constant 0 : index
    %154 = vector.load %arg0[%153, %c0_38, %c0_39] : memref<8x2x96xf32, #tpu.memory_space<vmem>>, vector<1x2x96xf32>
    %155 = vector.shape_cast %154 : vector<1x2x96xf32> to vector<2x96xf32>
    %cst_40 = arith.constant dense<0.000000e+00> : vector<2x96xf32>
    %156 = tpu.matmul %148, %0, %cst_40 {dimension_numbers = #tpu.dot_dimension_numbers<[1], [0], [0], [1], [0, 0, 1, 1], [], []>} : vector<2x32xf32>, vector<32x96xf32>, vector<2x96xf32> -> vector<2x96xf32>
    %157 = vector.extract_strided_slice %155 {offsets = [0, 0], sizes = [2, 64], strides = [1, 1]} : vector<2x96xf32> to vector<2x64xf32>
    %158 = vector.extract_strided_slice %156 {offsets = [0, 0], sizes = [2, 64], strides = [1, 1]} : vector<2x96xf32> to vector<2x64xf32>
    %159 = arith.addf %157, %158 : vector<2x64xf32>
    %160 = arith.negf %159 : vector<2x64xf32>
    %161 = math.exp %160 : vector<2x64xf32>
    %cst_41 = arith.constant 1.000000e+00 : f32
    %162 = vector.broadcast %cst_41 : f32 to vector<2x64xf32>
    %163 = arith.addf %162, %161 : vector<2x64xf32>
    %164 = arith.divf %162, %163 : vector<2x64xf32>
    %165 = vector.extract_strided_slice %164 {offsets = [0, 0], sizes = [2, 32], strides = [1, 1]} : vector<2x64xf32> to vector<2x32xf32>
    %166 = vector.extract_strided_slice %164 {offsets = [0, 32], sizes = [2, 32], strides = [1, 1]} : vector<2x64xf32> to vector<2x32xf32>
    %167 = vector.extract_strided_slice %155 {offsets = [0, 64], sizes = [2, 32], strides = [1, 1]} : vector<2x96xf32> to vector<2x32xf32>
    %168 = vector.extract_strided_slice %156 {offsets = [0, 64], sizes = [2, 32], strides = [1, 1]} : vector<2x96xf32> to vector<2x32xf32>
    %169 = vector.broadcast %1 : vector<1x32xf32> to vector<2x32xf32>
    %170 = arith.addf %168, %169 : vector<2x32xf32>
    %171 = arith.mulf %165, %170 : vector<2x32xf32>
    %172 = arith.addf %167, %171 : vector<2x32xf32>
    %173 = math.tanh %172 : vector<2x32xf32>
    %cst_42 = arith.constant 1.000000e+00 : f32
    %174 = vector.broadcast %cst_42 : f32 to vector<2x32xf32>
    %175 = arith.subf %174, %166 : vector<2x32xf32>
    %176 = arith.mulf %175, %173 : vector<2x32xf32>
    %177 = arith.mulf %166, %148 : vector<2x32xf32>
    %178 = arith.addf %176, %177 : vector<2x32xf32>
    %179 = arith.index_cast %c5_i32 : i32 to index
    %c0_43 = arith.constant 0 : index
    %c0_44 = arith.constant 0 : index
    %180 = vector.load %arg3[%179, %c0_43, %c0_44] : memref<8x2x32xf32, #tpu.memory_space<vmem>>, vector<1x2x32xf32>
    %181 = vector.shape_cast %180 : vector<1x2x32xf32> to vector<2x32xf32>
    %182 = vector.shape_cast %178 : vector<2x32xf32> to vector<1x2x32xf32>
    tpu.vector_store %arg3[%179, %c0_43, %c0_44], %182 {strides = array<i32>} : memref<8x2x32xf32, #tpu.memory_space<vmem>>, vector<1x2x32xf32>,
    %c6_i32 = arith.constant 6 : i32
    %183 = arith.index_cast %c6_i32 : i32 to index
    %c0_45 = arith.constant 0 : index
    %c0_46 = arith.constant 0 : index
    %184 = vector.load %arg0[%183, %c0_45, %c0_46] : memref<8x2x96xf32, #tpu.memory_space<vmem>>, vector<1x2x96xf32>
    %185 = vector.shape_cast %184 : vector<1x2x96xf32> to vector<2x96xf32>
    %cst_47 = arith.constant dense<0.000000e+00> : vector<2x96xf32>
    %186 = tpu.matmul %178, %0, %cst_47 {dimension_numbers = #tpu.dot_dimension_numbers<[1], [0], [0], [1], [0, 0, 1, 1], [], []>} : vector<2x32xf32>, vector<32x96xf32>, vector<2x96xf32> -> vector<2x96xf32>
    %187 = vector.extract_strided_slice %185 {offsets = [0, 0], sizes = [2, 64], strides = [1, 1]} : vector<2x96xf32> to vector<2x64xf32>
    %188 = vector.extract_strided_slice %186 {offsets = [0, 0], sizes = [2, 64], strides = [1, 1]} : vector<2x96xf32> to vector<2x64xf32>
    %189 = arith.addf %187, %188 : vector<2x64xf32>
    %190 = arith.negf %189 : vector<2x64xf32>
    %191 = math.exp %190 : vector<2x64xf32>
    %cst_48 = arith.constant 1.000000e+00 : f32
    %192 = vector.broadcast %cst_48 : f32 to vector<2x64xf32>
    %193 = arith.addf %192, %191 : vector<2x64xf32>
    %194 = arith.divf %192, %193 : vector<2x64xf32>
    %195 = vector.extract_strided_slice %194 {offsets = [0, 0], sizes = [2, 32], strides = [1, 1]} : vector<2x64xf32> to vector<2x32xf32>
    %196 = vector.extract_strided_slice %194 {offsets = [0, 32], sizes = [2, 32], strides = [1, 1]} : vector<2x64xf32> to vector<2x32xf32>
    %197 = vector.extract_strided_slice %185 {offsets = [0, 64], sizes = [2, 32], strides = [1, 1]} : vector<2x96xf32> to vector<2x32xf32>
    %198 = vector.extract_strided_slice %186 {offsets = [0, 64], sizes = [2, 32], strides = [1, 1]} : vector<2x96xf32> to vector<2x32xf32>
    %199 = vector.broadcast %1 : vector<1x32xf32> to vector<2x32xf32>
    %200 = arith.addf %198, %199 : vector<2x32xf32>
    %201 = arith.mulf %195, %200 : vector<2x32xf32>
    %202 = arith.addf %197, %201 : vector<2x32xf32>
    %203 = math.tanh %202 : vector<2x32xf32>
    %cst_49 = arith.constant 1.000000e+00 : f32
    %204 = vector.broadcast %cst_49 : f32 to vector<2x32xf32>
    %205 = arith.subf %204, %196 : vector<2x32xf32>
    %206 = arith.mulf %205, %203 : vector<2x32xf32>
    %207 = arith.mulf %196, %178 : vector<2x32xf32>
    %208 = arith.addf %206, %207 : vector<2x32xf32>
    %209 = arith.index_cast %c6_i32 : i32 to index
    %c0_50 = arith.constant 0 : index
    %c0_51 = arith.constant 0 : index
    %210 = vector.load %arg3[%209, %c0_50, %c0_51] : memref<8x2x32xf32, #tpu.memory_space<vmem>>, vector<1x2x32xf32>
    %211 = vector.shape_cast %210 : vector<1x2x32xf32> to vector<2x32xf32>
    %212 = vector.shape_cast %208 : vector<2x32xf32> to vector<1x2x32xf32>
    tpu.vector_store %arg3[%209, %c0_50, %c0_51], %212 {strides = array<i32>} : memref<8x2x32xf32, #tpu.memory_space<vmem>>, vector<1x2x32xf32>,
    %c7_i32 = arith.constant 7 : i32
    %213 = arith.index_cast %c7_i32 : i32 to index
    %c0_52 = arith.constant 0 : index
    %c0_53 = arith.constant 0 : index
    %214 = vector.load %arg0[%213, %c0_52, %c0_53] : memref<8x2x96xf32, #tpu.memory_space<vmem>>, vector<1x2x96xf32>
    %215 = vector.shape_cast %214 : vector<1x2x96xf32> to vector<2x96xf32>
    %cst_54 = arith.constant dense<0.000000e+00> : vector<2x96xf32>
    %216 = tpu.matmul %208, %0, %cst_54 {dimension_numbers = #tpu.dot_dimension_numbers<[1], [0], [0], [1], [0, 0, 1, 1], [], []>} : vector<2x32xf32>, vector<32x96xf32>, vector<2x96xf32> -> vector<2x96xf32>
    %217 = vector.extract_strided_slice %215 {offsets = [0, 0], sizes = [2, 64], strides = [1, 1]} : vector<2x96xf32> to vector<2x64xf32>
    %218 = vector.extract_strided_slice %216 {offsets = [0, 0], sizes = [2, 64], strides = [1, 1]} : vector<2x96xf32> to vector<2x64xf32>
    %219 = arith.addf %217, %218 : vector<2x64xf32>
    %220 = arith.negf %219 : vector<2x64xf32>
    %221 = math.exp %220 : vector<2x64xf32>
    %cst_55 = arith.constant 1.000000e+00 : f32
    %222 = vector.broadcast %cst_55 : f32 to vector<2x64xf32>
    %223 = arith.addf %222, %221 : vector<2x64xf32>
    %224 = arith.divf %222, %223 : vector<2x64xf32>
    %225 = vector.extract_strided_slice %224 {offsets = [0, 0], sizes = [2, 32], strides = [1, 1]} : vector<2x64xf32> to vector<2x32xf32>
    %226 = vector.extract_strided_slice %224 {offsets = [0, 32], sizes = [2, 32], strides = [1, 1]} : vector<2x64xf32> to vector<2x32xf32>
    %227 = vector.extract_strided_slice %215 {offsets = [0, 64], sizes = [2, 32], strides = [1, 1]} : vector<2x96xf32> to vector<2x32xf32>
    %228 = vector.extract_strided_slice %216 {offsets = [0, 64], sizes = [2, 32], strides = [1, 1]} : vector<2x96xf32> to vector<2x32xf32>
    %229 = vector.broadcast %1 : vector<1x32xf32> to vector<2x32xf32>
    %230 = arith.addf %228, %229 : vector<2x32xf32>
    %231 = arith.mulf %225, %230 : vector<2x32xf32>
    %232 = arith.addf %227, %231 : vector<2x32xf32>
    %233 = math.tanh %232 : vector<2x32xf32>
    %cst_56 = arith.constant 1.000000e+00 : f32
    %234 = vector.broadcast %cst_56 : f32 to vector<2x32xf32>
    %235 = arith.subf %234, %226 : vector<2x32xf32>
    %236 = arith.mulf %235, %233 : vector<2x32xf32>
    %237 = arith.mulf %226, %208 : vector<2x32xf32>
    %238 = arith.addf %236, %237 : vector<2x32xf32>
    %239 = arith.index_cast %c7_i32 : i32 to index
    %c0_57 = arith.constant 0 : index
    %c0_58 = arith.constant 0 : index
    %240 = vector.load %arg3[%239, %c0_57, %c0_58] : memref<8x2x32xf32, #tpu.memory_space<vmem>>, vector<1x2x32xf32>
    %241 = vector.shape_cast %240 : vector<1x2x32xf32> to vector<2x32xf32>
    %242 = vector.shape_cast %238 : vector<2x32xf32> to vector<1x2x32xf32>
    tpu.vector_store %arg3[%239, %c0_57, %c0_58], %242 {strides = array<i32>} : memref<8x2x32xf32, #tpu.memory_space<vmem>>, vector<1x2x32xf32>,
    %c8_i32 = arith.constant 8 : i32
    return
  }
}

</mosaic_0001>

<llo_original>
// kernel: simple_rnn_forward.1
$region0: #{simple_rnn_forward.1}
  #allocation0 [shape = 'u32[]', space=smem, size = 0x4, offset = 0x4, fixed_abs, tag = 'smem constant byte address 0x4 - core index']
  #allocation1 [shape = 'u32[144,128]{1,0:T(1,128)}', space=vmem, size = 0x12000, scoped, tag = 'internal scratch']
  %s0 = inlined_call_operand.vmem [shape: f32[8,2,96], index: 0, kind: input, shape index: {}]
  %s1 = inlined_call_operand.vmem [shape: f32[32,96], index: 1, kind: input, shape index: {}]
  %s2 = inlined_call_operand.vmem [shape: f32[1,32], index: 2, kind: input, shape index: {}]
  %s3 = inlined_call_operand.vmem [shape: f32[8,2,32], index: 3, kind: output, shape index: {}]
  %s4 = sld [smem:[#allocation0]]
  $region22: #{simple_rnn_forward.1} parent=0
    _
  %s6 = ssub.s32 1, %s4
  %s7 = scalar_select 0, %s6, %s4
  // Predicated region
  $region2: #{simple_rnn_forward.1} parent=0 // pred_check
    _
  $region3: #{simple_rnn_forward.1} parent=0 // pred_check_branch
    %9 = sbr.rel (0) target = $region5
  $region4: #{simple_rnn_forward.1} parent=0 // pred_region
    _
  $region5: #{simple_rnn_forward.1} parent=0 // pred_fallthru
    _
  // Predicated region
  $region6: #{simple_rnn_forward.1} parent=0 // pred_check
    _
  $region7: #{simple_rnn_forward.1} parent=0 // pred_check_branch
    %11 = sbr.rel (0) target = $region9
  $region8: #{simple_rnn_forward.1} parent=0 // pred_region
    _
  $region9: #{simple_rnn_forward.1} parent=0 // pred_fallthru
    _
  // Predicated region
  $region10: #{simple_rnn_forward.1} parent=0 // pred_check
    _
  $region11: #{simple_rnn_forward.1} parent=0 // pred_check_branch
    %13 = sbr.rel (0) target = $region13
  $region12: #{simple_rnn_forward.1} parent=0 // pred_region
    _
  $region13: #{simple_rnn_forward.1} parent=0 // pred_fallthru
    _
  %v14 = vld [vmem:[%s1] sm:$0xff]
  %v15 = vld [vmem:[%s1 + $0x8] sm:$0xff]
  %v16 = vld [vmem:[%s1 + $0x10] sm:$0xff]
  %v17 = vld [vmem:[%s1 + $0x18] sm:$0xff]
  %v18 = vld [vmem:[%s2] sm:$0x1]
  %v19 = vld [vmem:[%s0] sm:$0x3]
  %vm20 = vcmask 261120
  %v22 = vsel %vm20, 0.0, 0
  %24 = vmatprep.subr.mxu0 0.0
  %25 = vmatpush1.msra.mxu0 %v14
  %26 = vmatprep.subr.mxu0 0.0
  %27 = vmatpush1.msra.mxu0 %v15
  %28 = vmatprep.subr.mxu0 0.0
  %29 = vmatpush1.msra.mxu0 %v16
  %30 = vmatprep.subr.mxu0 0.0
  %31 = vmatpush1.msra.mxu0 %v17
  %32 = vmatprep.subr.mxu0 0.0
  %33 = vmatpush1.msra.mxu0 0.0
  %34 = vmatprep.subr.mxu0 0.0
  %35 = vmatpush1.msra.mxu0 0.0
  %36 = vmatprep.subr.mxu0 0.0
  %37 = vmatpush1.msra.mxu0 0.0
  %38 = vmatprep.subr.mxu0 0.0
  %39 = vmatpush1.msra.mxu0 0.0
  %40 = vmatprep.subr.mxu0 0.0
  %41 = vmatpush1.msra.mxu0 0.0
  %42 = vmatprep.subr.mxu0 0.0
  %43 = vmatpush1.msra.mxu0 0.0
  %44 = vmatprep.subr.mxu0 0.0
  %45 = vmatpush1.msra.mxu0 0.0
  %46 = vmatprep.subr.mxu0 0.0
  %47 = vmatpush1.msra.mxu0 0.0
  %48 = vmatprep.subr.mxu0 0.0
  %49 = vmatpush1.msra.mxu0 0.0
  %50 = vmatprep.subr.mxu0 0.0
  %51 = vmatpush1.msra.mxu0 0.0
  %52 = vmatprep.subr.mxu0 0.0
  %53 = vmatpush1.msra.mxu0 0.0
  %54 = vmatprep.subr.mxu0 0.0
  %55 = vmatpush1.msra.mxu0 0.0
  %56 = vmatprep.subr.mxu0 0.0
  %57 = vmatpush1.msra.mxu0 0.0
  %58 = vmatprep.subr.mxu0 0.0
  %59 = vmatpush1.msra.mxu0 0.0
  %60 = vmatprep.subr.mxu0 0.0
  %61 = vmatpush1.msra.mxu0 0.0
  %62 = vmatprep.subr.mxu0 0.0
  %63 = vmatpush1.msra.mxu0 0.0
  %64 = vmatprep.subr.mxu0 0.0
  %65 = vmatpush1.msra.mxu0 0.0
  %66 = vmatprep.subr.mxu0 0.0
  %67 = vmatpush1.msra.mxu0 0.0
  %68 = vmatprep.subr.mxu0 0.0
  %69 = vmatpush1.msra.mxu0 0.0
  %70 = vmatprep.subr.mxu0 0.0
  %71 = vmatpush1.msra.mxu0 0.0
  %72 = vmatprep.subr.mxu0 0.0
  %73 = vmatpush1.msra.mxu0 0.0
  %74 = vmatprep.subr.mxu0 0.0
  %75 = vmatpush1.msra.mxu0 0.0
  %76 = vmatprep.subr.mxu0 0.0
  %77 = vmatpush1.msra.mxu0 0.0
  %78 = vmatprep.subr.mxu0 0.0
  %79 = vmatpush1.msra.mxu0 0.0
  %80 = vmatprep.subr.mxu0 0.0
  %81 = vmatpush1.msra.mxu0 0.0
  %82 = vmatprep.subr.mxu0 0.0
  %83 = vmatpush1.msra.mxu0 0.0
  %84 = vmatprep.subr.mxu0 0.0
  %85 = vmatpush1.msra.mxu0 0.0
  %86 = vmatprep.subr.mxu0 0.0
  %87 = vmatpush1.msra.mxu0 0.0
  %88 = vmatprep.mubr.f32.mxu0 0.0
  %89 = vmatmul.mubr.f32.gmra.mrb[0].mxu0 %v22
  %v90 = vpop.f32.mrb[0].mxu0
  %v91 = vadd.f32 0.0, %v90
  %v92 = vpop.f32.mrb[0].mxu0
  %93 = vdwg.mxu0
  %v94 = vadd.f32 %v19, %v91
  %v95 = vxor.u32 %v94, 2147483648
  %v96 = vmul.f32 %v95, 1.442695
  %v97 = vpow.pop %v96
  %v98 = vadd.f32 %v97, 1.0
  %v99 = vrcp.pop %v98
  %v100 = vmul.f32 1.0, %v99
  %v102 = vlaneseq
  %v103 = vshrl.u32 %v102, 7
  %v104 = vsub.s32 0, %v103
  %v105 = vrot.slane %v18, %v104
  %106 = vrot.lane.b32.xlu0 %v105, 64
  %v107 = vpop.permute.xlu0 %106
  %v109 = vadd.f32 %v91, %v107
  %111 = vrot.lane.b32.xlu0 %v109, 64
  %v112 = vpop.permute.xlu0 %111
  %v114 = vmul.f32 %v100, %v112
  %116 = vrot.lane.b32.xlu0 %v114, 64
  %v117 = vpop.permute.xlu0 %116
  %v119 = vadd.f32 %v19, %v117
  %v120 = vtanh.pop %v119
  %v121 = vsub.f32 1.0, %v100
  %123 = vrot.lane.b32.xlu0 %v120, 96
  %v124 = vpop.permute.xlu0 %123
  %v126 = vmul.f32 %v121, %v124
  %v127 = vmul.f32 %v100, 0.0
  %v128 = vadd.f32 %v126, %v127
  %130 = vrot.lane.b32.xlu0 %v128, 96
  %v131 = vpop.permute.xlu0 %130
  %vm133 = vcmask 254976
  %134 = vst.msk [vmem:[%s3] sm:$0x3] %vm133, %v131
  %s135 = scalar_lea.vmem %s0, 2
  %v136 = vld [vmem:[%s135] sm:$0x3]
  %v137 = vsel %vm20, %v131, 0
  %139 = vmatprep.subr.mxu0 0.0
  %140 = vmatpush1.msra.mxu0 %v14
  %141 = vmatprep.subr.mxu0 0.0
  %142 = vmatpush1.msra.mxu0 %v15
  %143 = vmatprep.subr.mxu0 0.0
  %144 = vmatpush1.msra.mxu0 %v16
  %145 = vmatprep.subr.mxu0 0.0
  %146 = vmatpush1.msra.mxu0 %v17
  %147 = vmatprep.subr.mxu0 0.0
  %148 = vmatpush1.msra.mxu0 0.0
  %149 = vmatprep.subr.mxu0 0.0
  %150 = vmatpush1.msra.mxu0 0.0
  %151 = vmatprep.subr.mxu0 0.0
  %152 = vmatpush1.msra.mxu0 0.0
  %153 = vmatprep.subr.mxu0 0.0
  %154 = vmatpush1.msra.mxu0 0.0
  %155 = vmatprep.subr.mxu0 0.0
  %156 = vmatpush1.msra.mxu0 0.0
  %157 = vmatprep.subr.mxu0 0.0
  %158 = vmatpush1.msra.mxu0 0.0
  %159 = vmatprep.subr.mxu0 0.0
  %160 = vmatpush1.msra.mxu0 0.0
  %161 = vmatprep.subr.mxu0 0.0
  %162 = vmatpush1.msra.mxu0 0.0
  %163 = vmatprep.subr.mxu0 0.0
  %164 = vmatpush1.msra.mxu0 0.0
  %165 = vmatprep.subr.mxu0 0.0
  %166 = vmatpush1.msra.mxu0 0.0
  %167 = vmatprep.subr.mxu0 0.0
  %168 = vmatpush1.msra.mxu0 0.0
  %169 = vmatprep.subr.mxu0 0.0
  %170 = vmatpush1.msra.mxu0 0.0
  %171 = vmatprep.subr.mxu0 0.0
  %172 = vmatpush1.msra.mxu0 0.0
  %173 = vmatprep.subr.mxu0 0.0
  %174 = vmatpush1.msra.mxu0 0.0
  %175 = vmatprep.subr.mxu0 0.0
  %176 = vmatpush1.msra.mxu0 0.0
  %177 = vmatprep.subr.mxu0 0.0
  %178 = vmatpush1.msra.mxu0 0.0
  %179 = vmatprep.subr.mxu0 0.0
  %180 = vmatpush1.msra.mxu0 0.0
  %181 = vmatprep.subr.mxu0 0.0
  %182 = vmatpush1.msra.mxu0 0.0
  %183 = vmatprep.subr.mxu0 0.0
  %184 = vmatpush1.msra.mxu0 0.0
  %185 = vmatprep.subr.mxu0 0.0
  %186 = vmatpush1.msra.mxu0 0.0
  %187 = vmatprep.subr.mxu0 0.0
  %188 = vmatpush1.msra.mxu0 0.0
  %189 = vmatprep.subr.mxu0 0.0
  %190 = vmatpush1.msra.mxu0 0.0
  %191 = vmatprep.subr.mxu0 0.0
  %192 = vmatpush1.msra.mxu0 0.0
  %193 = vmatprep.subr.mxu0 0.0
  %194 = vmatpush1.msra.mxu0 0.0
  %195 = vmatprep.subr.mxu0 0.0
  %196 = vmatpush1.msra.mxu0 0.0
  %197 = vmatprep.subr.mxu0 0.0
  %198 = vmatpush1.msra.mxu0 0.0
  %199 = vmatprep.subr.mxu0 0.0
  %200 = vmatpush1.msra.mxu0 0.0
  %201 = vmatprep.subr.mxu0 0.0
  %202 = vmatpush1.msra.mxu0 0.0
  %203 = vmatprep.mubr.f32.mxu0 0.0
  %204 = vmatmul.mubr.f32.gmra.mrb[0].mxu0 %v137
  %v205 = vpop.f32.mrb[0].mxu0
  %v206 = vadd.f32 0.0, %v205
  %v207 = vpop.f32.mrb[0].mxu0
  %208 = vdwg.mxu0
  %v209 = vadd.f32 %v136, %v206
  %v210 = vxor.u32 %v209, 2147483648
  %v211 = vmul.f32 %v210, 1.442695
  %v212 = vpow.pop %v211
  %v213 = vadd.f32 %v212, 1.0
  %v214 = vrcp.pop %v213
  %v215 = vmul.f32 1.0, %v214
  %v216 = vadd.f32 %v206, %v107
  %218 = vrot.lane.b32.xlu0 %v216, 64
  %v219 = vpop.permute.xlu0 %218
  %v221 = vmul.f32 %v215, %v219
  %223 = vrot.lane.b32.xlu0 %v221, 64
  %v224 = vpop.permute.xlu0 %223
  %v226 = vadd.f32 %v136, %v224
  %v227 = vtanh.pop %v226
  %v228 = vsub.f32 1.0, %v215
  %230 = vrot.lane.b32.xlu0 %v227, 96
  %v231 = vpop.permute.xlu0 %230
  %v233 = vmul.f32 %v228, %v231
  %v234 = vmul.f32 %v215, %v128
  %v235 = vadd.f32 %v233, %v234
  %237 = vrot.lane.b32.xlu0 %v235, 96
  %v238 = vpop.permute.xlu0 %237
  %s240 = scalar_lea.vmem %s3, 2
  %241 = vst.msk [vmem:[%s240] sm:$0x3] %vm133, %v238
  %s242 = scalar_lea.vmem %s0, 4
  %v243 = vld [vmem:[%s242] sm:$0x3]
  %v244 = vsel %vm20, %v238, 0
  %246 = vmatprep.subr.mxu0 0.0
  %247 = vmatpush1.msra.mxu0 %v14
  %248 = vmatprep.subr.mxu0 0.0
  %249 = vmatpush1.msra.mxu0 %v15
  %250 = vmatprep.subr.mxu0 0.0
  %251 = vmatpush1.msra.mxu0 %v16
  %252 = vmatprep.subr.mxu0 0.0
  %253 = vmatpush1.msra.mxu0 %v17
  %254 = vmatprep.subr.mxu0 0.0
  %255 = vmatpush1.msra.mxu0 0.0
  %256 = vmatprep.subr.mxu0 0.0
  %257 = vmatpush1.msra.mxu0 0.0
  %258 = vmatprep.subr.mxu0 0.0
  %259 = vmatpush1.msra.mxu0 0.0
  %260 = vmatprep.subr.mxu0 0.0
  %261 = vmatpush1.msra.mxu0 0.0
  %262 = vmatprep.subr.mxu0 0.0
  %263 = vmatpush1.msra.mxu0 0.0
  %264 = vmatprep.subr.mxu0 0.0
  %265 = vmatpush1.msra.mxu0 0.0
  %266 = vmatprep.subr.mxu0 0.0
  %267 = vmatpush1.msra.mxu0 0.0
  %268 = vmatprep.subr.mxu0 0.0
  %269 = vmatpush1.msra.mxu0 0.0
  %270 = vmatprep.subr.mxu0 0.0
  %271 = vmatpush1.msra.mxu0 0.0
  %272 = vmatprep.subr.mxu0 0.0
  %273 = vmatpush1.msra.mxu0 0.0
  %274 = vmatprep.subr.mxu0 0.0
  %275 = vmatpush1.msra.mxu0 0.0
  %276 = vmatprep.subr.mxu0 0.0
  %277 = vmatpush1.msra.mxu0 0.0
  %278 = vmatprep.subr.mxu0 0.0
  %279 = vmatpush1.msra.mxu0 0.0
  %280 = vmatprep.subr.mxu0 0.0
  %281 = vmatpush1.msra.mxu0 0.0
  %282 = vmatprep.subr.mxu0 0.0
  %283 = vmatpush1.msra.mxu0 0.0
  %284 = vmatprep.subr.mxu0 0.0
  %285 = vmatpush1.msra.mxu0 0.0
  %286 = vmatprep.subr.mxu0 0.0
  %287 = vmatpush1.msra.mxu0 0.0
  %288 = vmatprep.subr.mxu0 0.0
  %289 = vmatpush1.msra.mxu0 0.0
  %290 = vmatprep.subr.mxu0 0.0
  %291 = vmatpush1.msra.mxu0 0.0
  %292 = vmatprep.subr.mxu0 0.0
  %293 = vmatpush1.msra.mxu0 0.0
  %294 = vmatprep.subr.mxu0 0.0
  %295 = vmatpush1.msra.mxu0 0.0
  %296 = vmatprep.subr.mxu0 0.0
  %297 = vmatpush1.msra.mxu0 0.0
  %298 = vmatprep.subr.mxu0 0.0
  %299 = vmatpush1.msra.mxu0 0.0
  %300 = vmatprep.subr.mxu0 0.0
  %301 = vmatpush1.msra.mxu0 0.0
  %302 = vmatprep.subr.mxu0 0.0
  %303 = vmatpush1.msra.mxu0 0.0
  %304 = vmatprep.subr.mxu0 0.0
  %305 = vmatpush1.msra.mxu0 0.0
  %306 = vmatprep.subr.mxu0 0.0
  %307 = vmatpush1.msra.mxu0 0.0
  %308 = vmatprep.subr.mxu0 0.0
  %309 = vmatpush1.msra.mxu0 0.0
  %310 = vmatprep.mubr.f32.mxu0 0.0
  %311 = vmatmul.mubr.f32.gmra.mrb[0].mxu0 %v244
  %v312 = vpop.f32.mrb[0].mxu0
  %v313 = vadd.f32 0.0, %v312
  %v314 = vpop.f32.mrb[0].mxu0
  %315 = vdwg.mxu0
  %v316 = vadd.f32 %v243, %v313
  %v317 = vxor.u32 %v316, 2147483648
  %v318 = vmul.f32 %v317, 1.442695
  %v319 = vpow.pop %v318
  %v320 = vadd.f32 %v319, 1.0
  %v321 = vrcp.pop %v320
  %v322 = vmul.f32 1.0, %v321
  %v323 = vadd.f32 %v313, %v107
  %325 = vrot.lane.b32.xlu0 %v323, 64
  %v326 = vpop.permute.xlu0 %325
  %v328 = vmul.f32 %v322, %v326
  %330 = vrot.lane.b32.xlu0 %v328, 64
  %v331 = vpop.permute.xlu0 %330
  %v333 = vadd.f32 %v243, %v331
  %v334 = vtanh.pop %v333
  %v335 = vsub.f32 1.0, %v322
  %337 = vrot.lane.b32.xlu0 %v334, 96
  %v338 = vpop.permute.xlu0 %337
  %v340 = vmul.f32 %v335, %v338
  %v341 = vmul.f32 %v322, %v235
  %v342 = vadd.f32 %v340, %v341
  %344 = vrot.lane.b32.xlu0 %v342, 96
  %v345 = vpop.permute.xlu0 %344
  %s347 = scalar_lea.vmem %s3, 4
  %348 = vst.msk [vmem:[%s347] sm:$0x3] %vm133, %v345
  %s349 = scalar_lea.vmem %s0, 6
  %v350 = vld [vmem:[%s349] sm:$0x3]
  %v351 = vsel %vm20, %v345, 0
  %353 = vmatprep.subr.mxu0 0.0
  %354 = vmatpush1.msra.mxu0 %v14
  %355 = vmatprep.subr.mxu0 0.0
  %356 = vmatpush1.msra.mxu0 %v15
  %357 = vmatprep.subr.mxu0 0.0
  %358 = vmatpush1.msra.mxu0 %v16
  %359 = vmatprep.subr.mxu0 0.0
  %360 = vmatpush1.msra.mxu0 %v17
  %361 = vmatprep.subr.mxu0 0.0
  %362 = vmatpush1.msra.mxu0 0.0
  %363 = vmatprep.subr.mxu0 0.0
  %364 = vmatpush1.msra.mxu0 0.0
  %365 = vmatprep.subr.mxu0 0.0
  %366 = vmatpush1.msra.mxu0 0.0
  %367 = vmatprep.subr.mxu0 0.0
  %368 = vmatpush1.msra.mxu0 0.0
  %369 = vmatprep.subr.mxu0 0.0
  %370 = vmatpush1.msra.mxu0 0.0
  %371 = vmatprep.subr.mxu0 0.0
  %372 = vmatpush1.msra.mxu0 0.0
  %373 = vmatprep.subr.mxu0 0.0
  %374 = vmatpush1.msra.mxu0 0.0
  %375 = vmatprep.subr.mxu0 0.0
  %376 = vmatpush1.msra.mxu0 0.0
  %377 = vmatprep.subr.mxu0 0.0
  %378 = vmatpush1.msra.mxu0 0.0
  %379 = vmatprep.subr.mxu0 0.0
  %380 = vmatpush1.msra.mxu0 0.0
  %381 = vmatprep.subr.mxu0 0.0
  %382 = vmatpush1.msra.mxu0 0.0
  %383 = vmatprep.subr.mxu0 0.0
  %384 = vmatpush1.msra.mxu0 0.0
  %385 = vmatprep.subr.mxu0 0.0
  %386 = vmatpush1.msra.mxu0 0.0
  %387 = vmatprep.subr.mxu0 0.0
  %388 = vmatpush1.msra.mxu0 0.0
  %389 = vmatprep.subr.mxu0 0.0
  %390 = vmatpush1.msra.mxu0 0.0
  %391 = vmatprep.subr.mxu0 0.0
  %392 = vmatpush1.msra.mxu0 0.0
  %393 = vmatprep.subr.mxu0 0.0
  %394 = vmatpush1.msra.mxu0 0.0
  %395 = vmatprep.subr.mxu0 0.0
  %396 = vmatpush1.msra.mxu0 0.0
  %397 = vmatprep.subr.mxu0 0.0
  %398 = vmatpush1.msra.mxu0 0.0
  %399 = vmatprep.subr.mxu0 0.0
  %400 = vmatpush1.msra.mxu0 0.0
  %401 = vmatprep.subr.mxu0 0.0
  %402 = vmatpush1.msra.mxu0 0.0
  %403 = vmatprep.subr.mxu0 0.0
  %404 = vmatpush1.msra.mxu0 0.0
  %405 = vmatprep.subr.mxu0 0.0
  %406 = vmatpush1.msra.mxu0 0.0
  %407 = vmatprep.subr.mxu0 0.0
  %408 = vmatpush1.msra.mxu0 0.0
  %409 = vmatprep.subr.mxu0 0.0
  %410 = vmatpush1.msra.mxu0 0.0
  %411 = vmatprep.subr.mxu0 0.0
  %412 = vmatpush1.msra.mxu0 0.0
  %413 = vmatprep.subr.mxu0 0.0
  %414 = vmatpush1.msra.mxu0 0.0
  %415 = vmatprep.subr.mxu0 0.0
  %416 = vmatpush1.msra.mxu0 0.0
  %417 = vmatprep.mubr.f32.mxu0 0.0
  %418 = vmatmul.mubr.f32.gmra.mrb[0].mxu0 %v351
  %v419 = vpop.f32.mrb[0].mxu0
  %v420 = vadd.f32 0.0, %v419
  %v421 = vpop.f32.mrb[0].mxu0
  %422 = vdwg.mxu0
  %v423 = vadd.f32 %v350, %v420
  %v424 = vxor.u32 %v423, 2147483648
  %v425 = vmul.f32 %v424, 1.442695
  %v426 = vpow.pop %v425
  %v427 = vadd.f32 %v426, 1.0
  %v428 = vrcp.pop %v427
  %v429 = vmul.f32 1.0, %v428
  %v430 = vadd.f32 %v420, %v107
  %432 = vrot.lane.b32.xlu0 %v430, 64
  %v433 = vpop.permute.xlu0 %432
  %v435 = vmul.f32 %v429, %v433
  %437 = vrot.lane.b32.xlu0 %v435, 64
  %v438 = vpop.permute.xlu0 %437
  %v440 = vadd.f32 %v350, %v438
  %v441 = vtanh.pop %v440
  %v442 = vsub.f32 1.0, %v429
  %444 = vrot.lane.b32.xlu0 %v441, 96
  %v445 = vpop.permute.xlu0 %444
  %v447 = vmul.f32 %v442, %v445
  %v448 = vmul.f32 %v429, %v342
  %v449 = vadd.f32 %v447, %v448
  %451 = vrot.lane.b32.xlu0 %v449, 96
  %v452 = vpop.permute.xlu0 %451
  %s454 = scalar_lea.vmem %s3, 6
  %455 = vst.msk [vmem:[%s454] sm:$0x3] %vm133, %v452
  %s456 = scalar_lea.vmem %s0, 8
  %v457 = vld [vmem:[%s456] sm:$0x3]
  %v458 = vsel %vm20, %v452, 0
  %460 = vmatprep.subr.mxu0 0.0
  %461 = vmatpush1.msra.mxu0 %v14
  %462 = vmatprep.subr.mxu0 0.0
  %463 = vmatpush1.msra.mxu0 %v15
  %464 = vmatprep.subr.mxu0 0.0
  %465 = vmatpush1.msra.mxu0 %v16
  %466 = vmatprep.subr.mxu0 0.0
  %467 = vmatpush1.msra.mxu0 %v17
  %468 = vmatprep.subr.mxu0 0.0
  %469 = vmatpush1.msra.mxu0 0.0
  %470 = vmatprep.subr.mxu0 0.0
  %471 = vmatpush1.msra.mxu0 0.0
  %472 = vmatprep.subr.mxu0 0.0
  %473 = vmatpush1.msra.mxu0 0.0
  %474 = vmatprep.subr.mxu0 0.0
  %475 = vmatpush1.msra.mxu0 0.0
  %476 = vmatprep.subr.mxu0 0.0
  %477 = vmatpush1.msra.mxu0 0.0
  %478 = vmatprep.subr.mxu0 0.0
  %479 = vmatpush1.msra.mxu0 0.0
  %480 = vmatprep.subr.mxu0 0.0
  %481 = vmatpush1.msra.mxu0 0.0
  %482 = vmatprep.subr.mxu0 0.0
  %483 = vmatpush1.msra.mxu0 0.0
  %484 = vmatprep.subr.mxu0 0.0
  %485 = vmatpush1.msra.mxu0 0.0
  %486 = vmatprep.subr.mxu0 0.0
  %487 = vmatpush1.msra.mxu0 0.0
  %488 = vmatprep.subr.mxu0 0.0
  %489 = vmatpush1.msra.mxu0 0.0
  %490 = vmatprep.subr.mxu0 0.0
  %491 = vmatpush1.msra.mxu0 0.0
  %492 = vmatprep.subr.mxu0 0.0
  %493 = vmatpush1.msra.mxu0 0.0
  %494 = vmatprep.subr.mxu0 0.0
  %495 = vmatpush1.msra.mxu0 0.0
  %496 = vmatprep.subr.mxu0 0.0
  %497 = vmatpush1.msra.mxu0 0.0
  %498 = vmatprep.subr.mxu0 0.0
  %499 = vmatpush1.msra.mxu0 0.0
  %500 = vmatprep.subr.mxu0 0.0
  %501 = vmatpush1.msra.mxu0 0.0
  %502 = vmatprep.subr.mxu0 0.0
  %503 = vmatpush1.msra.mxu0 0.0
  %504 = vmatprep.subr.mxu0 0.0
  %505 = vmatpush1.msra.mxu0 0.0
  %506 = vmatprep.subr.mxu0 0.0
  %507 = vmatpush1.msra.mxu0 0.0
  %508 = vmatprep.subr.mxu0 0.0
  %509 = vmatpush1.msra.mxu0 0.0
  %510 = vmatprep.subr.mxu0 0.0
  %511 = vmatpush1.msra.mxu0 0.0
  %512 = vmatprep.subr.mxu0 0.0
  %513 = vmatpush1.msra.mxu0 0.0
  %514 = vmatprep.subr.mxu0 0.0
  %515 = vmatpush1.msra.mxu0 0.0
  %516 = vmatprep.subr.mxu0 0.0
  %517 = vmatpush1.msra.mxu0 0.0
  %518 = vmatprep.subr.mxu0 0.0
  %519 = vmatpush1.msra.mxu0 0.0
  %520 = vmatprep.subr.mxu0 0.0
  %521 = vmatpush1.msra.mxu0 0.0
  %522 = vmatprep.subr.mxu0 0.0
  %523 = vmatpush1.msra.mxu0 0.0
  %524 = vmatprep.mubr.f32.mxu0 0.0
  %525 = vmatmul.mubr.f32.gmra.mrb[0].mxu0 %v458
  %v526 = vpop.f32.mrb[0].mxu0
  %v527 = vadd.f32 0.0, %v526
  %v528 = vpop.f32.mrb[0].mxu0
  %529 = vdwg.mxu0
  %v530 = vadd.f32 %v457, %v527
  %v531 = vxor.u32 %v530, 2147483648
  %v532 = vmul.f32 %v531, 1.442695
  %v533 = vpow.pop %v532
  %v534 = vadd.f32 %v533, 1.0
  %v535 = vrcp.pop %v534
  %v536 = vmul.f32 1.0, %v535
  %v537 = vadd.f32 %v527, %v107
  %539 = vrot.lane.b32.xlu0 %v537, 64
  %v540 = vpop.permute.xlu0 %539
  %v542 = vmul.f32 %v536, %v540
  %544 = vrot.lane.b32.xlu0 %v542, 64
  %v545 = vpop.permute.xlu0 %544
  %v547 = vadd.f32 %v457, %v545
  %v548 = vtanh.pop %v547
  %v549 = vsub.f32 1.0, %v536
  %551 = vrot.lane.b32.xlu0 %v548, 96
  %v552 = vpop.permute.xlu0 %551
  %v554 = vmul.f32 %v549, %v552
  %v555 = vmul.f32 %v536, %v449
  %v556 = vadd.f32 %v554, %v555
  %558 = vrot.lane.b32.xlu0 %v556, 96
  %v559 = vpop.permute.xlu0 %558
  %s561 = scalar_lea.vmem %s3, 8
  %562 = vst.msk [vmem:[%s561] sm:$0x3] %vm133, %v559
  %s563 = scalar_lea.vmem %s0, 10
  %v564 = vld [vmem:[%s563] sm:$0x3]
  %v565 = vsel %vm20, %v559, 0
  %567 = vmatprep.subr.mxu0 0.0
  %568 = vmatpush1.msra.mxu0 %v14
  %569 = vmatprep.subr.mxu0 0.0
  %570 = vmatpush1.msra.mxu0 %v15
  %571 = vmatprep.subr.mxu0 0.0
  %572 = vmatpush1.msra.mxu0 %v16
  %573 = vmatprep.subr.mxu0 0.0
  %574 = vmatpush1.msra.mxu0 %v17
  %575 = vmatprep.subr.mxu0 0.0
  %576 = vmatpush1.msra.mxu0 0.0
  %577 = vmatprep.subr.mxu0 0.0
  %578 = vmatpush1.msra.mxu0 0.0
  %579 = vmatprep.subr.mxu0 0.0
  %580 = vmatpush1.msra.mxu0 0.0
  %581 = vmatprep.subr.mxu0 0.0
  %582 = vmatpush1.msra.mxu0 0.0
  %583 = vmatprep.subr.mxu0 0.0
  %584 = vmatpush1.msra.mxu0 0.0
  %585 = vmatprep.subr.mxu0 0.0
  %586 = vmatpush1.msra.mxu0 0.0
  %587 = vmatprep.subr.mxu0 0.0
  %588 = vmatpush1.msra.mxu0 0.0
  %589 = vmatprep.subr.mxu0 0.0
  %590 = vmatpush1.msra.mxu0 0.0
  %591 = vmatprep.subr.mxu0 0.0
  %592 = vmatpush1.msra.mxu0 0.0
  %593 = vmatprep.subr.mxu0 0.0
  %594 = vmatpush1.msra.mxu0 0.0
  %595 = vmatprep.subr.mxu0 0.0
  %596 = vmatpush1.msra.mxu0 0.0
  %597 = vmatprep.subr.mxu0 0.0
  %598 = vmatpush1.msra.mxu0 0.0
  %599 = vmatprep.subr.mxu0 0.0
  %600 = vmatpush1.msra.mxu0 0.0
  %601 = vmatprep.subr.mxu0 0.0
  %602 = vmatpush1.msra.mxu0 0.0
  %603 = vmatprep.subr.mxu0 0.0
  %604 = vmatpush1.msra.mxu0 0.0
  %605 = vmatprep.subr.mxu0 0.0
  %606 = vmatpush1.msra.mxu0 0.0
  %607 = vmatprep.subr.mxu0 0.0
  %608 = vmatpush1.msra.mxu0 0.0
  %609 = vmatprep.subr.mxu0 0.0
  %610 = vmatpush1.msra.mxu0 0.0
  %611 = vmatprep.subr.mxu0 0.0
  %612 = vmatpush1.msra.mxu0 0.0
  %613 = vmatprep.subr.mxu0 0.0
  %614 = vmatpush1.msra.mxu0 0.0
  %615 = vmatprep.subr.mxu0 0.0
  %616 = vmatpush1.msra.mxu0 0.0
  %617 = vmatprep.subr.mxu0 0.0
  %618 = vmatpush1.msra.mxu0 0.0
  %619 = vmatprep.subr.mxu0 0.0
  %620 = vmatpush1.msra.mxu0 0.0
  %621 = vmatprep.subr.mxu0 0.0
  %622 = vmatpush1.msra.mxu0 0.0
  %623 = vmatprep.subr.mxu0 0.0
  %624 = vmatpush1.msra.mxu0 0.0
  %625 = vmatprep.subr.mxu0 0.0
  %626 = vmatpush1.msra.mxu0 0.0
  %627 = vmatprep.subr.mxu0 0.0
  %628 = vmatpush1.msra.mxu0 0.0
  %629 = vmatprep.subr.mxu0 0.0
  %630 = vmatpush1.msra.mxu0 0.0
  %631 = vmatprep.mubr.f32.mxu0 0.0
  %632 = vmatmul.mubr.f32.gmra.mrb[0].mxu0 %v565
  %v633 = vpop.f32.mrb[0].mxu0
  %v634 = vadd.f32 0.0, %v633
  %v635 = vpop.f32.mrb[0].mxu0
  %636 = vdwg.mxu0
  %v637 = vadd.f32 %v564, %v634
  %v638 = vxor.u32 %v637, 2147483648
  %v639 = vmul.f32 %v638, 1.442695
  %v640 = vpow.pop %v639
  %v641 = vadd.f32 %v640, 1.0
  %v642 = vrcp.pop %v641
  %v643 = vmul.f32 1.0, %v642
  %v644 = vadd.f32 %v634, %v107
  %646 = vrot.lane.b32.xlu0 %v644, 64
  %v647 = vpop.permute.xlu0 %646
  %v649 = vmul.f32 %v643, %v647
  %651 = vrot.lane.b32.xlu0 %v649, 64
  %v652 = vpop.permute.xlu0 %651
  %v654 = vadd.f32 %v564, %v652
  %v655 = vtanh.pop %v654
  %v656 = vsub.f32 1.0, %v643
  %658 = vrot.lane.b32.xlu0 %v655, 96
  %v659 = vpop.permute.xlu0 %658
  %v661 = vmul.f32 %v656, %v659
  %v662 = vmul.f32 %v643, %v556
  %v663 = vadd.f32 %v661, %v662
  %665 = vrot.lane.b32.xlu0 %v663, 96
  %v666 = vpop.permute.xlu0 %665
  %s668 = scalar_lea.vmem %s3, 10
  %669 = vst.msk [vmem:[%s668] sm:$0x3] %vm133, %v666
  %s670 = scalar_lea.vmem %s0, 12
  %v671 = vld [vmem:[%s670] sm:$0x3]
  %v672 = vsel %vm20, %v666, 0
  %674 = vmatprep.subr.mxu0 0.0
  %675 = vmatpush1.msra.mxu0 %v14
  %676 = vmatprep.subr.mxu0 0.0
  %677 = vmatpush1.msra.mxu0 %v15
  %678 = vmatprep.subr.mxu0 0.0
  %679 = vmatpush1.msra.mxu0 %v16
  %680 = vmatprep.subr.mxu0 0.0
  %681 = vmatpush1.msra.mxu0 %v17
  %682 = vmatprep.subr.mxu0 0.0
  %683 = vmatpush1.msra.mxu0 0.0
  %684 = vmatprep.subr.mxu0 0.0
  %685 = vmatpush1.msra.mxu0 0.0
  %686 = vmatprep.subr.mxu0 0.0
  %687 = vmatpush1.msra.mxu0 0.0
  %688 = vmatprep.subr.mxu0 0.0
  %689 = vmatpush1.msra.mxu0 0.0
  %690 = vmatprep.subr.mxu0 0.0
  %691 = vmatpush1.msra.mxu0 0.0
  %692 = vmatprep.subr.mxu0 0.0
  %693 = vmatpush1.msra.mxu0 0.0
  %694 = vmatprep.subr.mxu0 0.0
  %695 = vmatpush1.msra.mxu0 0.0
  %696 = vmatprep.subr.mxu0 0.0
  %697 = vmatpush1.msra.mxu0 0.0
  %698 = vmatprep.subr.mxu0 0.0
  %699 = vmatpush1.msra.mxu0 0.0
  %700 = vmatprep.subr.mxu0 0.0
  %701 = vmatpush1.msra.mxu0 0.0
  %702 = vmatprep.subr.mxu0 0.0
  %703 = vmatpush1.msra.mxu0 0.0
  %704 = vmatprep.subr.mxu0 0.0
  %705 = vmatpush1.msra.mxu0 0.0
  %706 = vmatprep.subr.mxu0 0.0
  %707 = vmatpush1.msra.mxu0 0.0
  %708 = vmatprep.subr.mxu0 0.0
  %709 = vmatpush1.msra.mxu0 0.0
  %710 = vmatprep.subr.mxu0 0.0
  %711 = vmatpush1.msra.mxu0 0.0
  %712 = vmatprep.subr.mxu0 0.0
  %713 = vmatpush1.msra.mxu0 0.0
  %714 = vmatprep.subr.mxu0 0.0
  %715 = vmatpush1.msra.mxu0 0.0
  %716 = vmatprep.subr.mxu0 0.0
  %717 = vmatpush1.msra.mxu0 0.0
  %718 = vmatprep.subr.mxu0 0.0
  %719 = vmatpush1.msra.mxu0 0.0
  %720 = vmatprep.subr.mxu0 0.0
  %721 = vmatpush1.msra.mxu0 0.0
  %722 = vmatprep.subr.mxu0 0.0
  %723 = vmatpush1.msra.mxu0 0.0
  %724 = vmatprep.subr.mxu0 0.0
  %725 = vmatpush1.msra.mxu0 0.0
  %726 = vmatprep.subr.mxu0 0.0
  %727 = vmatpush1.msra.mxu0 0.0
  %728 = vmatprep.subr.mxu0 0.0
  %729 = vmatpush1.msra.mxu0 0.0
  %730 = vmatprep.subr.mxu0 0.0
  %731 = vmatpush1.msra.mxu0 0.0
  %732 = vmatprep.subr.mxu0 0.0
  %733 = vmatpush1.msra.mxu0 0.0
  %734 = vmatprep.subr.mxu0 0.0
  %735 = vmatpush1.msra.mxu0 0.0
  %736 = vmatprep.subr.mxu0 0.0
  %737 = vmatpush1.msra.mxu0 0.0
  %738 = vmatprep.mubr.f32.mxu0 0.0
  %739 = vmatmul.mubr.f32.gmra.mrb[0].mxu0 %v672
  %v740 = vpop.f32.mrb[0].mxu0
  %v741 = vadd.f32 0.0, %v740
  %v742 = vpop.f32.mrb[0].mxu0
  %743 = vdwg.mxu0
  %v744 = vadd.f32 %v671, %v741
  %v745 = vxor.u32 %v744, 2147483648
  %v746 = vmul.f32 %v745, 1.442695
  %v747 = vpow.pop %v746
  %v748 = vadd.f32 %v747, 1.0
  %v749 = vrcp.pop %v748
  %v750 = vmul.f32 1.0, %v749
  %v751 = vadd.f32 %v741, %v107
  %753 = vrot.lane.b32.xlu0 %v751, 64
  %v754 = vpop.permute.xlu0 %753
  %v756 = vmul.f32 %v750, %v754
  %758 = vrot.lane.b32.xlu0 %v756, 64
  %v759 = vpop.permute.xlu0 %758
  %v761 = vadd.f32 %v671, %v759
  %v762 = vtanh.pop %v761
  %v763 = vsub.f32 1.0, %v750
  %765 = vrot.lane.b32.xlu0 %v762, 96
  %v766 = vpop.permute.xlu0 %765
  %v768 = vmul.f32 %v763, %v766
  %v769 = vmul.f32 %v750, %v663
  %v770 = vadd.f32 %v768, %v769
  %772 = vrot.lane.b32.xlu0 %v770, 96
  %v773 = vpop.permute.xlu0 %772
  %s775 = scalar_lea.vmem %s3, 12
  %776 = vst.msk [vmem:[%s775] sm:$0x3] %vm133, %v773
  %s777 = scalar_lea.vmem %s0, 14
  %v778 = vld [vmem:[%s777] sm:$0x3]
  %v779 = vsel %vm20, %v773, 0
  %781 = vmatprep.subr.mxu0 0.0
  %782 = vmatpush1.msra.mxu0 %v14
  %783 = vmatprep.subr.mxu0 0.0
  %784 = vmatpush1.msra.mxu0 %v15
  %785 = vmatprep.subr.mxu0 0.0
  %786 = vmatpush1.msra.mxu0 %v16
  %787 = vmatprep.subr.mxu0 0.0
  %788 = vmatpush1.msra.mxu0 %v17
  %789 = vmatprep.subr.mxu0 0.0
  %790 = vmatpush1.msra.mxu0 0.0
  %791 = vmatprep.subr.mxu0 0.0
  %792 = vmatpush1.msra.mxu0 0.0
  %793 = vmatprep.subr.mxu0 0.0
  %794 = vmatpush1.msra.mxu0 0.0
  %795 = vmatprep.subr.mxu0 0.0
  %796 = vmatpush1.msra.mxu0 0.0
  %797 = vmatprep.subr.mxu0 0.0
  %798 = vmatpush1.msra.mxu0 0.0
  %799 = vmatprep.subr.mxu0 0.0
  %800 = vmatpush1.msra.mxu0 0.0
  %801 = vmatprep.subr.mxu0 0.0
  %802 = vmatpush1.msra.mxu0 0.0
  %803 = vmatprep.subr.mxu0 0.0
  %804 = vmatpush1.msra.mxu0 0.0
  %805 = vmatprep.subr.mxu0 0.0
  %806 = vmatpush1.msra.mxu0 0.0
  %807 = vmatprep.subr.mxu0 0.0
  %808 = vmatpush1.msra.mxu0 0.0
  %809 = vmatprep.subr.mxu0 0.0
  %810 = vmatpush1.msra.mxu0 0.0
  %811 = vmatprep.subr.mxu0 0.0
  %812 = vmatpush1.msra.mxu0 0.0
  %813 = vmatprep.subr.mxu0 0.0
  %814 = vmatpush1.msra.mxu0 0.0
  %815 = vmatprep.subr.mxu0 0.0
  %816 = vmatpush1.msra.mxu0 0.0
  %817 = vmatprep.subr.mxu0 0.0
  %818 = vmatpush1.msra.mxu0 0.0
  %819 = vmatprep.subr.mxu0 0.0
  %820 = vmatpush1.msra.mxu0 0.0
  %821 = vmatprep.subr.mxu0 0.0
  %822 = vmatpush1.msra.mxu0 0.0
  %823 = vmatprep.subr.mxu0 0.0
  %824 = vmatpush1.msra.mxu0 0.0
  %825 = vmatprep.subr.mxu0 0.0
  %826 = vmatpush1.msra.mxu0 0.0
  %827 = vmatprep.subr.mxu0 0.0
  %828 = vmatpush1.msra.mxu0 0.0
  %829 = vmatprep.subr.mxu0 0.0
  %830 = vmatpush1.msra.mxu0 0.0
  %831 = vmatprep.subr.mxu0 0.0
  %832 = vmatpush1.msra.mxu0 0.0
  %833 = vmatprep.subr.mxu0 0.0
  %834 = vmatpush1.msra.mxu0 0.0
  %835 = vmatprep.subr.mxu0 0.0
  %836 = vmatpush1.msra.mxu0 0.0
  %837 = vmatprep.subr.mxu0 0.0
  %838 = vmatpush1.msra.mxu0 0.0
  %839 = vmatprep.subr.mxu0 0.0
  %840 = vmatpush1.msra.mxu0 0.0
  %841 = vmatprep.subr.mxu0 0.0
  %842 = vmatpush1.msra.mxu0 0.0
  %843 = vmatprep.subr.mxu0 0.0
  %844 = vmatpush1.msra.mxu0 0.0
  %845 = vmatprep.mubr.f32.mxu0 0.0
  %846 = vmatmul.mubr.f32.gmra.mrb[0].mxu0 %v779
  %v847 = vpop.f32.mrb[0].mxu0
  %v848 = vadd.f32 0.0, %v847
  %v849 = vpop.f32.mrb[0].mxu0
  %850 = vdwg.mxu0
  %v851 = vadd.f32 %v778, %v848
  %v852 = vxor.u32 %v851, 2147483648
  %v853 = vmul.f32 %v852, 1.442695
  %v854 = vpow.pop %v853
  %v855 = vadd.f32 %v854, 1.0
  %v856 = vrcp.pop %v855
  %v857 = vmul.f32 1.0, %v856
  %v858 = vadd.f32 %v848, %v107
  %860 = vrot.lane.b32.xlu0 %v858, 64
  %v861 = vpop.permute.xlu0 %860
  %v863 = vmul.f32 %v857, %v861
  %865 = vrot.lane.b32.xlu0 %v863, 64
  %v866 = vpop.permute.xlu0 %865
  %v868 = vadd.f32 %v778, %v866
  %v869 = vtanh.pop %v868
  %v870 = vsub.f32 1.0, %v857
  %872 = vrot.lane.b32.xlu0 %v869, 96
  %v873 = vpop.permute.xlu0 %872
  %v875 = vmul.f32 %v870, %v873
  %v876 = vmul.f32 %v857, %v770
  %v877 = vadd.f32 %v875, %v876
  %879 = vrot.lane.b32.xlu0 %v877, 96
  %v880 = vpop.permute.xlu0 %879
  %s882 = scalar_lea.vmem %s3, 14
  %883 = vst.msk [vmem:[%s882] sm:$0x3] %vm133, %v880
  // Predicated region
  $region14: #{simple_rnn_forward.1} parent=0 // pred_check
    _
  $region15: #{simple_rnn_forward.1} parent=0 // pred_check_branch
    %885 = sbr.rel (0) target = $region17
  $region16: #{simple_rnn_forward.1} parent=0 // pred_region
    _
  $region17: #{simple_rnn_forward.1} parent=0 // pred_fallthru
    _
  // Predicated region
  $region18: #{simple_rnn_forward.1} parent=0 // pred_check
    _
  $region19: #{simple_rnn_forward.1} parent=0 // pred_check_branch
    %887 = sbr.rel (0) target = $region21
  $region20: #{simple_rnn_forward.1} parent=0 // pred_region
    _
  $region21: #{simple_rnn_forward.1} parent=0 // pred_fallthru
    _

</llo_original>
